<compile_context>
chip_gen: v5e
topology: v5e:2x2
jax: 0.10.0
libtpu: 0.0.40
codegen_flags: <defaults>
</compile_context>

<pallas_src>
import jax
import jax.numpy as jnp
from jax.experimental import pallas as pl
from jax.experimental.pallas import tpu as pltpu


def _round_up(x, m):
    return -(-x // m) * m


def _classifier_kernel(x_ref, w_ref, b_ref, o_ref):
    # x_ref: (tile_rows, H)   streamed activation tile (caller dtype), VMEM
    # w_ref: (1, H)           classifier weight row (same dtype as x), VMEM (resident)
    # b_ref: (1,)             f32 bias scalar, SMEM
    # o_ref: (1, tile_rows)   lane-dense f32 scores
    s = jax.lax.dot_general(
        w_ref[...], x_ref[...],
        dimension_numbers=(((1,), (1,)), ((), ())),   # contract H with H -> (1, tile_rows)
        preferred_element_type=jnp.float32,
    )
    o_ref[...] = s + b_ref[0]


def _choose_tile_rows(rows, H, itemsize, requested):
    """Multiple-of-128 row tile: fits double-buffered in ~28 MiB, >=2 tiles if possible."""
    budget = 28 << 20                                     # 2x streamed-x tile budget
    by_vmem = max(128, ((budget // (2 * H * itemsize)) // 128) * 128)
    t = max(128, min((requested // 128) * 128, by_vmem, 8192))
    if rows <= t:
        if rows >= 512:
            # Enough work: split in two so v7x's two TensorCores both get a tile.
            t = _round_up(pl.cdiv(rows, 2), 128)
        else:
            # Tiny input: one block equal to the full array dims (always legal).
            t = rows
    return t


def fact_selector_head(hidden, weight, bias, *, tile_rows=8192):
    """hidden: [B, S, H] (f32 or bf16), weight: [1, H], bias: [1] -> scores [B, S, 1] f32."""
    B, S, H = hidden.shape
    rows = B * S

    x2d = hidden.reshape(rows, H)              # free reshape; no cast, no host-side pad
    itemsize = x2d.dtype.itemsize

    tile_rows = _choose_tile_rows(rows, H, itemsize, tile_rows)
    num_tiles = pl.cdiv(rows, tile_rows)       # ragged last tile handled by Pallas padding
    rows_out = num_tiles * tile_rows

    w2d = weight.reshape(1, H).astype(x2d.dtype)   # tiny; matches activation dtype for the MXU
    b1 = bias.astype(jnp.float32).reshape(1)

    # Only x is streamed (double-buffered); weight/output blocks are tiny.
    tile_bytes = tile_rows * H * itemsize
    vmem_limit = int(min(max(2 * tile_bytes + (4 << 20), 16 << 20), 48 << 20))

    out = pl.pallas_call(
        _classifier_kernel,
        out_shape=jax.ShapeDtypeStruct((1, rows_out), jnp.float32),
        grid_spec=pltpu.PrefetchScalarGridSpec(
            num_scalar_prefetch=0,
            grid=(num_tiles,),
            in_specs=[
                pl.BlockSpec((tile_rows, H), lambda i: (i, 0)),
                pl.BlockSpec((1, H), lambda i: (0, 0)),
                pl.BlockSpec(memory_space=pltpu.MemorySpace.SMEM),
            ],
            out_specs=pl.BlockSpec((1, tile_rows), lambda i: (0, i)),
        ),
        compiler_params=pltpu.CompilerParams(
            dimension_semantics=("parallel",),
            vmem_limit_bytes=vmem_limit,
        ),
        cost_estimate=pl.CostEstimate(
            flops=2 * rows_out * H,
            transcendentals=0,
            bytes_accessed=rows_out * H * itemsize + rows_out * 4 + H * itemsize,
        ),
    )(x2d, w2d, b1)

    # Padded tail rows (if any) contain garbage scores; they are sliced away here
    # and must never be reduced over downstream.
    return out[0, :rows].reshape(B, S, 1)


def init_params(key, hidden_size):
    """Matches nn.init.xavier_normal_ on Linear(H, 1).weight, zero bias."""
    std = (2.0 / (1.0 + hidden_size)) ** 0.5
    w = jax.random.normal(key, (1, hidden_size), dtype=jnp.float32) * std
    b = jnp.zeros((1,), dtype=jnp.float32)
    return w, b


def _reference(hidden, weight, bias):
    # VPU-exact f32 reference (elementwise multiply + reduce), quantizing x/w to
    # the same dtype the kernel consumes, then accumulating in f32.
    B, S, H = hidden.shape
    xq = hidden.reshape(B * S, H).astype(jnp.float32)
    wq = weight.astype(hidden.dtype).astype(jnp.float32).reshape(1, H)
    ref = jnp.sum(xq * wq, axis=-1, keepdims=True) + bias.astype(jnp.float32).reshape(1, 1)
    return ref.reshape(B, S, 1)


if __name__ == "__main__":
    key = jax.random.PRNGKey(0)
    k_x, k_w, k_x2 = jax.random.split(key, 3)

    # 1) Small, RoBERTa-like hidden states; zero bias (module init); single full-dims tile.
    B, S, H = 2, 8, 64
    hidden = jax.random.normal(k_x, (B, S, H), dtype=jnp.float32)
    weight, bias = init_params(k_w, H)
    scores = jax.block_until_ready(fact_selector_head(hidden, weight, bias))
    assert scores.shape == (B, S, 1)
    ref = _reference(hidden, weight, bias)
    assert jnp.allclose(scores, ref, atol=2e-2, rtol=2e-2), "mismatch vs f32 reference"

    # 2) Multi-tile grid with a ragged last tile and a nonzero bias.
    B2, S2, H2 = 2, 1000, 256
    hidden2 = jax.random.normal(k_x2, (B2, S2, H2), dtype=jnp.float32)
    weight2, _ = init_params(k_w, H2)
    bias2 = jnp.full((1,), 0.25, dtype=jnp.float32)
    scores2 = jax.block_until_ready(
        fact_selector_head(hidden2, weight2, bias2, tile_rows=512))
    assert scores2.shape == (B2, S2, 1)
    ref2 = _reference(hidden2, weight2, bias2)
    assert jnp.allclose(scores2, ref2, atol=2e-2, rtol=2e-2), "mismatch vs f32 reference (2)"

    # 3) bf16 activations from the encoder (halved HBM traffic path), same weights.
    hidden3 = hidden2.astype(jnp.bfloat16)
    scores3 = jax.block_until_ready(
        fact_selector_head(hidden3, weight2, bias2, tile_rows=512))
    ref3 = _reference(hidden3, weight2, bias2)
    assert jnp.allclose(scores3, ref3, atol=1e-3, rtol=1e-3), "mismatch vs bf16 reference"

    print("KERNEL_OK")
</pallas_src>

<mosaic_0001>
module attributes {stable_mosaic.version = 11 : i64} {
  func.func @_classifier_kernel(%arg0: i32, %arg1: memref<16x64xf32, #tpu.memory_space<vmem>>, %arg2: memref<1x64xf32, #tpu.memory_space<vmem>>, %arg3: memref<1xf32, #tpu.memory_space<smem>>, %arg4: memref<1x16xf32, #tpu.memory_space<vmem>>) attributes {dimension_semantics = [#tpu.dimension_semantics<parallel>], iteration_bounds = array<i64: 1>, scalar_prefetch = 0 : i64, scratch_operands = 0 : i64, tpu.core_type = #tpu.core_type<tc>, window_params = [{transform_indices = @transform_0, window_bounds = array<i64: 16, 64>}, {pipeline_mode = #tpu.pipeline_mode<synchronous>, transform_indices = @transform_1, window_bounds = array<i64: 1, 64>}, {transform_indices = @transform_2, window_bounds = array<i64: 1>}, {transform_indices = @transform_3, window_bounds = array<i64: 1, 16>}]} {
    %c0 = arith.constant 0 : index
    %c0_0 = arith.constant 0 : index
    %0 = vector.load %arg2[%c0, %c0_0] : memref<1x64xf32, #tpu.memory_space<vmem>>, vector<1x64xf32>
    %c0_1 = arith.constant 0 : index
    %c0_2 = arith.constant 0 : index
    %1 = vector.load %arg1[%c0_1, %c0_2] : memref<16x64xf32, #tpu.memory_space<vmem>>, vector<16x64xf32>
    %cst = arith.constant dense<0.000000e+00> : vector<1x16xf32>
    %2 = tpu.matmul %0, %1, %cst {dimension_numbers = #tpu.dot_dimension_numbers<[1], [1], [0], [0], [0, 0, 1, 0], [], []>} : vector<1x64xf32>, vector<16x64xf32>, vector<1x16xf32> -> vector<1x16xf32>
    %c0_3 = arith.constant 0 : index
    %3 = memref.load %arg3[%c0_3] : memref<1xf32, #tpu.memory_space<smem>>
    %4 = vector.broadcast %3 : f32 to vector<1x16xf32>
    %5 = arith.addf %2, %4 : vector<1x16xf32>
    %c0_4 = arith.constant 0 : index
    %c0_5 = arith.constant 0 : index
    %6 = vector.load %arg4[%c0_4, %c0_5] : memref<1x16xf32, #tpu.memory_space<vmem>>, vector<1x16xf32>
    tpu.vector_store %arg4[%c0_4, %c0_5], %5 {strides = array<i32>} : memref<1x16xf32, #tpu.memory_space<vmem>>, vector<1x16xf32>,
    return
  }
  func.func @transform_0(%arg0: i32) -> (i32, i32) {
    %c0_i32 = arith.constant 0 : i32
    %c0_i32_0 = arith.constant 0 : i32
    return %arg0, %c0_i32 : i32, i32
  }
  func.func @transform_1(%arg0: i32) -> (i32, i32) {
    %c0_i32 = arith.constant 0 : i32
    %c0_i32_0 = arith.constant 0 : i32
    %c0_i32_1 = arith.constant 0 : i32
    return %c0_i32, %c0_i32_0 : i32, i32
  }
  func.func @transform_2(%arg0: i32) -> i32 {
    %c0_i32 = arith.constant 0 : i32
    %c0_i32_0 = arith.constant 0 : i32
    return %c0_i32 : i32
  }
  func.func @transform_3(%arg0: i32) -> (i32, i32) {
    %c0_i32 = arith.constant 0 : i32
    %c0_i32_0 = arith.constant 0 : i32
    return %c0_i32, %arg0 : i32, i32
  }
}

</mosaic_0001>

<llo_original>
// kernel: tpu_custom_call.1
$region0: #{tpu_custom_call.1}
  #allocation0 [shape = 'u32[]', space=smem, size = 0x4, offset = 0x4, fixed_abs, tag = 'smem constant byte address 0x4 - core index']
  #allocation1 [shape = 'u32[72,128]{1,0:T(1,128)}', space=vmem, size = 0x9000, scoped, tag = 'internal scratch']
  #allocation2 [shape = 'f32[1]{0:T(128)S(6)}', space=smem, size = 0x200, scoped, tag = 'scoped memory for tpu_custom_call.1']
  %s0 = inlined_call_operand.hbm [shape: f32[16,64], index: 0, kind: input, shape index: {}]
  %s1 = inlined_call_operand.vmem [shape: f32[1,64], index: 1, kind: input, shape index: {}]
  %s2 = inlined_call_operand.<no memory space> [shape: f32[1], index: 2, kind: input, shape index: {}]
  %s3 = inlined_call_operand.hbm [shape: f32[1,16], index: 3, kind: output, shape index: {}]
  %s4 = sld [smem:[#allocation0]]
  $region26: #{tpu_custom_call.1} parent=0
    _
  %s6 = ssub.s32 1, %s4
  %s7 = scalar_select 0, %s6, %s4
  %8 = sst [smem:[#allocation2]] %s2
  $region1: #{tpu_custom_call.1} parent=0
    #allocation3 [shape = 'u8[8192]{0}', space=vmem, size = 0x2000, scoped, tag = 'input window, operand 0, single buffered']
    #allocation4 [shape = 's32[1]{0}', space=sflag, size = 0x4, scoped, tag = 'scoped memory for tpu_custom_call.1']
    #allocation5 [shape = 's32[1]{0}', space=sflag, size = 0x4, scoped, tag = 'scoped memory for tpu_custom_call.1']
    #allocation6 [shape = 'u8[512]{0}', space=vmem, size = 0x400, scoped, tag = 'output window, operand 0, single buffered']
    %9 = vsyncpa [#allocation4], 0
    %10 = vsyncpa [#allocation5], 0
    // Predicated region
    $region2: #{tpu_custom_call.1} parent=1 // pred_check
      _
    $region3: #{tpu_custom_call.1} parent=1 // pred_check_branch
      %12 = sbr.rel (0) target = $region5
    $region4: #{tpu_custom_call.1} parent=1 // pred_region
      %14 = vsyncadd [#allocation4], 0
      %s15 = sshll.u32 %s0, 4
      %s16 = int_to_ptr.hbm [resolvable:$true] %s15
      %s17 = sshll.u32 [#allocation3], 4
      %s18 = int_to_ptr.vmem [resolvable:$true] %s17
      %23 = dma.hbm_to_vmem [thread:$0]  %s16, 256, %s18, [#allocation4], 128, 128, 8
    $region5: #{tpu_custom_call.1} parent=1 // pred_fallthru
      _
    // Predicated region
    $region6: #{tpu_custom_call.1} parent=1 // pred_check
      _
    $region7: #{tpu_custom_call.1} parent=1 // pred_check_branch
      %25 = sbr.rel (0) target = $region9
    $region8: #{tpu_custom_call.1} parent=1 // pred_region
      _
    $region9: #{tpu_custom_call.1} parent=1 // pred_fallthru
      _
    // Predicated region
    $region10: #{tpu_custom_call.1} parent=1 // pred_check
      _
    $region11: #{tpu_custom_call.1} parent=1 // pred_check_branch
      %27 = sbr.rel (0) target = $region13
    $region12: #{tpu_custom_call.1} parent=1 // pred_region
      _
    $region13: #{tpu_custom_call.1} parent=1 // pred_fallthru
      _
    // Predicated region
    $region14: #{tpu_custom_call.1} parent=1 // pred_check
      _
    $region15: #{tpu_custom_call.1} parent=1 // pred_check_branch
      %29 = sbr.rel (0) target = $region17
    $region16: #{tpu_custom_call.1} parent=1 // pred_region
      %31 = dma.done [#allocation4], 256
    $region17: #{tpu_custom_call.1} parent=1 // pred_fallthru
      _
    %v32 = vld [vmem:[%s1] sm:$0x1]
    %v33 = vld [vmem:[#allocation3] sm:$0xff]
    %v34 = vld [vmem:[#allocation3 + $0x8] sm:$0xff]
    %s35 = sld [smem:[#allocation2]]
    %v36 = vstv %s35
    %vm37 = vcmask 523264
    %v39 = vsel %vm37, %v32, 0
    %v42 = vsel %vm37, %v33, 0
    %v45 = vsel %vm37, %v34, 0
    %47 = vmatpush.xpose.msra.mxu0 0.0
    %48 = vmatpush.xpose.msra.mxu0 0.0
    %49 = vmatpush.xpose.msra.mxu0 0.0
    %50 = vmatpush.xpose.msra.mxu0 0.0
    %51 = vmatpush.xpose.msra.mxu0 0.0
    %52 = vmatpush.xpose.msra.mxu0 0.0
    %53 = vmatpush.xpose.msra.mxu0 0.0
    %54 = vmatpush.xpose.msra.mxu0 0.0
    %55 = vmatpush.xpose.msra.mxu0 0.0
    %56 = vmatpush.xpose.msra.mxu0 0.0
    %57 = vmatpush.xpose.msra.mxu0 0.0
    %58 = vmatpush.xpose.msra.mxu0 0.0
    %59 = vmatpush.xpose.msra.mxu0 0.0
    %60 = vmatpush.xpose.msra.mxu0 0.0
    %61 = vmatpush.xpose.msra.mxu0 %v45
    %62 = vmatpush.xpose.msra.mxu0 %v42
    %63 = vmatmul.f32.gmra.mxu0 %v39
    %v64 = vpop.f32.mrf.mxu0
    %v65 = vadd.f32 %v36, %v64
    %66 = vdwg.mxu0
    %vm67 = vcmask 122880
    %68 = vst.msk [vmem:[#allocation6] sm:$0x1] %vm67, %v65
    // Predicated region
    $region18: #{tpu_custom_call.1} parent=1 // pred_check
      _
    $region19: #{tpu_custom_call.1} parent=1 // pred_check_branch
      %70 = sbr.rel (0) target = $region21
    $region20: #{tpu_custom_call.1} parent=1 // pred_region
      %72 = vsyncadd [#allocation5], 0
      %s74 = sshll.u32 [#allocation6], 4
      %s75 = int_to_ptr.vmem [resolvable:$true] %s74
      %s76 = sshll.u32 %s3, 4
      %s77 = int_to_ptr.hbm [resolvable:$true] %s76
      %79 = dma.vmem_to_hbm [thread:$0]  %s75, 16, %s77, [#allocation5]
    $region21: #{tpu_custom_call.1} parent=1 // pred_fallthru
      _
    // Predicated region
    $region22: #{tpu_custom_call.1} parent=1 // pred_check
      _
    $region23: #{tpu_custom_call.1} parent=1 // pred_check_branch
      %81 = sbr.rel (0) target = $region25
    $region24: #{tpu_custom_call.1} parent=1 // pred_region
      %83 = dma.done [#allocation5], 16
    $region25: #{tpu_custom_call.1} parent=1 // pred_fallthru
      _
    %84 = vsyncpa [#allocation4], 1
    %85 = vsyncpa [#allocation5], 1

</llo_original>
